<compile_context>
chip_gen: v5e
topology: v5e:2x2
jax: 0.10.0
libtpu: 0.0.40
codegen_flags: <defaults>
</compile_context>

<pallas_src>
import functools
import math

import jax
import jax.numpy as jnp
from jax.experimental import pallas as pl
from jax.experimental.pallas import tpu as pltpu


def _round_up(x: int, m: int) -> int:
    return ((x + m - 1) // m) * m


def _apply_activation(x, activation):
    if activation == "relu":
        return jnp.maximum(x, 0.0)
    if activation == "gelu":
        return jax.nn.gelu(x)
    if activation in (None, "identity"):
        return x
    raise ValueError(f"unsupported activation: {activation!r}")


def _prediction_block_kernel(x_ref, w_ref, b_ref, o_ref, *, activation):
    # x_ref: (TM, K), w_ref: (K, N), b_ref: (1, N), o_ref: (TM, N)
    acc = jnp.dot(x_ref[...], w_ref[...], preferred_element_type=jnp.float32)
    acc = acc + b_ref[...].astype(jnp.float32)           # broadcast bias over rows
    o_ref[...] = _apply_activation(acc, activation).astype(o_ref.dtype)


def prediction_block(x, weight, bias, *, activation="relu", block_m=None,
                     io_dtype=None):
    """Fused Linear + activation.

    x:      (..., in_dim)
    weight: (in_dim, out_dim)   (transpose of torch's (out_dim, in_dim))
    bias:   (out_dim,)
    returns (..., out_dim)
    """
    *lead, in_dim = x.shape
    out_dim = weight.shape[1]
    m = int(math.prod(lead)) if lead else 1

    if io_dtype is not None:
        # HBM-level cast: halves x/weight/output DMA bytes on this
        # memory-bound kernel (f32 accumulate happens in-kernel).
        x = x.astype(io_dtype)
        weight = weight.astype(io_dtype)
    out_dtype = x.dtype

    x2d = x.reshape(m, in_dim)
    b2d = bias.reshape(1, out_dim)

    x_item = jnp.dtype(x.dtype).itemsize
    w_item = jnp.dtype(weight.dtype).itemsize
    o_item = jnp.dtype(out_dtype).itemsize
    b_item = jnp.dtype(bias.dtype).itemsize

    # ---- per-generation VMEM budget -----------------------------------------
    try:
        vmem_cap = int(pltpu.get_tpu_info().vmem_capacity_bytes)
    except Exception:
        vmem_cap = 64 * 1024 * 1024  # conservative (v7x-sized) fallback
    big_vmem = vmem_cap >= 100 * 1024 * 1024          # v5e / v6e (128 MiB)
    vmem_target = (64 if big_vmem else 20) * 1024 * 1024
    vmem_limit_cap = (96 if big_vmem else 30) * 1024 * 1024
    default_block_m = 2048 if big_vmem else 512

    # Does this jax support pipeline_mode / Buffered on BlockSpec?
    try:
        pl.BlockSpec((8, 128), lambda i: (0, 0), pipeline_mode=pl.Buffered(1))
        pm_ok = True
    except Exception:
        pm_ok = False
    w_bufs = 1 if pm_ok else 2       # resident weight single-buffered if possible

    # ---- tiling decisions ----------------------------------------------------
    # bf16 rows pack 2-per-sublane -> 16-row alignment; f32 -> 8.
    row_align = 16 if (x_item < 4 or o_item < 4) else 8

    fixed_bytes = w_bufs * in_dim * out_dim * w_item + 2 * 8 * out_dim * b_item

    def per_row_bytes(x_bufs):
        return x_bufs * in_dim * x_item + 2 * out_dim * o_item

    tm_budget = max(row_align,
                    (vmem_target - fixed_bytes) // max(per_row_bytes(2), 1))
    tm = min(tm_budget, block_m or default_block_m, _round_up(m, row_align))
    tm = max(row_align, (tm // row_align) * row_align)
    grid_m = pl.cdiv(m, tm)

    # Keep both TensorCores busy on v7x (one extra step elsewhere is noise).
    if grid_m == 1 and tm >= 256:
        tm = _round_up(pl.cdiv(m, 2), row_align)
        grid_m = pl.cdiv(m, tm)

    # Small tiles -> keep the x stream 3 deep so DMA issue latency stays hidden.
    x_bufs = 3 if tm <= 128 else 2

    est_bytes = fixed_bytes + per_row_bytes(x_bufs) * tm
    vmem_limit = int(min(vmem_limit_cap,
                         max(est_bytes + est_bytes // 2, 16 * 1024 * 1024)))

    cost = pl.CostEstimate(
        flops=2 * m * in_dim * out_dim,
        transcendentals=0,
        bytes_accessed=(m * in_dim * x_item + in_dim * out_dim * w_item
                        + out_dim * b_item + m * out_dim * o_item),
    )

    kernel = functools.partial(_prediction_block_kernel, activation=activation)

    # ---- pallas_call ---------------------------------------------------------
    def _call(use_pm):
        def spec(shape, index_map, bufs=None):
            if use_pm and bufs is not None:
                return pl.BlockSpec(shape, index_map,
                                    pipeline_mode=pl.Buffered(bufs))
            return pl.BlockSpec(shape, index_map)

        return pl.pallas_call(
            kernel,
            out_shape=jax.ShapeDtypeStruct((m, out_dim), out_dtype),
            grid_spec=pltpu.PrefetchScalarGridSpec(
                num_scalar_prefetch=0,
                grid=(grid_m,),
                in_specs=[
                    # x tile: pipelined along rows (3-deep when tiles are small).
                    spec((tm, in_dim), lambda i: (i, 0),
                         x_bufs if x_bufs != 2 else None),
                    # weight / bias: constant block index -> resident, 1 buffer.
                    spec((in_dim, out_dim), lambda i: (0, 0), 1),
                    spec((1, out_dim), lambda i: (0, 0), 1),
                ],
                out_specs=pl.BlockSpec((tm, out_dim), lambda i: (i, 0)),
            ),
            compiler_params=pltpu.CompilerParams(
                dimension_semantics=("parallel",),   # row tiles independent
                vmem_limit_bytes=vmem_limit,
            ),
            cost_estimate=cost,
        )(x2d, weight, b2d)

    if pm_ok:
        try:
            out2d = _call(True)
        except Exception:
            out2d = _call(False)     # retry without pipeline_mode hints
    else:
        out2d = _call(False)

    return out2d.reshape(*lead, out_dim)


def init_linear_params(key, in_dim, out_dim):
    """Deterministic init mimicking nn.Linear defaults."""
    kw, kb = jax.random.split(key)
    bound = 1.0 / math.sqrt(in_dim)
    # torch stores (out_dim, in_dim); we keep the transpose (in_dim, out_dim).
    weight = jax.random.uniform(kw, (in_dim, out_dim), jnp.float32, -bound, bound)
    bias = jax.random.uniform(kb, (out_dim,), jnp.float32, -bound, bound)
    return weight, bias


def _reference(x, weight, bias):
    y = jnp.einsum("...i,io->...o", x, weight,
                   precision=jax.lax.Precision.HIGHEST) + bias
    return jnp.maximum(y, 0.0)


if __name__ == "__main__":
    key = jax.random.PRNGKey(0)
    k_x, k_p, k_x2, k_p2 = jax.random.split(key, 4)

    # Case 1: small config consistent with the module's forward (batch, seq, in_dim).
    batch, seq, in_dim, out_dim = 2, 8, 32, 32
    x = jax.random.normal(k_x, (batch, seq, in_dim), jnp.float32)
    weight, bias = init_linear_params(k_p, in_dim, out_dim)

    y = prediction_block(x, weight, bias)
    jax.block_until_ready(y)
    y_ref = _reference(x, weight, bias)
    assert y.shape == (batch, seq, out_dim)
    assert jnp.allclose(y, y_ref, atol=1e-5, rtol=1e-5)

    # Case 2: larger, lane-aligned out_dim, partial trailing row block (m=1200, TM=512).
    batch2, seq2, in2, out2 = 4, 300, 256, 256
    x2 = jax.random.normal(k_x2, (batch2, seq2, in2), jnp.float32)
    w2, b2 = init_linear_params(k_p2, in2, out2)
    y2 = prediction_block(x2, w2, b2, block_m=512)
    jax.block_until_ready(y2)
    y2_ref = _reference(x2, w2, b2)
    assert y2.shape == (batch2, seq2, out2)
    assert jnp.allclose(y2, y2_ref, atol=1e-4, rtol=1e-4)

    # Case 3: bf16 HBM I/O path (halved DMA bytes; looser tolerance).
    y3 = prediction_block(x2, w2, b2, io_dtype=jnp.bfloat16)
    jax.block_until_ready(y3)
    assert y3.dtype == jnp.bfloat16
    assert jnp.allclose(y3.astype(jnp.float32), y2_ref, atol=5e-2, rtol=5e-2)

    print("KERNEL_OK")
</pallas_src>

<mosaic_0001>
module attributes {stable_mosaic.version = 11 : i64} {
  func.func @_prediction_block_kernel(%arg0: i32, %arg1: memref<16x32xf32, #tpu.memory_space<vmem>>, %arg2: memref<32x32xf32, #tpu.memory_space<vmem>>, %arg3: memref<1x32xf32, #tpu.memory_space<vmem>>, %arg4: memref<16x32xf32, #tpu.memory_space<vmem>>) attributes {dimension_semantics = [#tpu.dimension_semantics<parallel>], iteration_bounds = array<i64: 1>, scalar_prefetch = 0 : i64, scratch_operands = 0 : i64, tpu.core_type = #tpu.core_type<tc>, window_params = [{transform_indices = @transform_0, window_bounds = array<i64: 16, 32>}, {pipeline_mode = #tpu.pipeline_mode<synchronous>, transform_indices = @transform_1, window_bounds = array<i64: 32, 32>}, {pipeline_mode = #tpu.pipeline_mode<synchronous>, transform_indices = @transform_2, window_bounds = array<i64: 1, 32>}, {transform_indices = @transform_3, window_bounds = array<i64: 16, 32>}]} {
    %c0 = arith.constant 0 : index
    %c0_0 = arith.constant 0 : index
    %0 = vector.load %arg1[%c0, %c0_0] : memref<16x32xf32, #tpu.memory_space<vmem>>, vector<16x32xf32>
    %c0_1 = arith.constant 0 : index
    %c0_2 = arith.constant 0 : index
    %1 = vector.load %arg2[%c0_1, %c0_2] : memref<32x32xf32, #tpu.memory_space<vmem>>, vector<32x32xf32>
    %cst = arith.constant dense<0.000000e+00> : vector<16x32xf32>
    %2 = tpu.matmul %0, %1, %cst {dimension_numbers = #tpu.dot_dimension_numbers<[1], [0], [0], [1], [0, 0, 1, 1], [], []>} : vector<16x32xf32>, vector<32x32xf32>, vector<16x32xf32> -> vector<16x32xf32>
    %c0_3 = arith.constant 0 : index
    %c0_4 = arith.constant 0 : index
    %3 = vector.load %arg3[%c0_3, %c0_4] : memref<1x32xf32, #tpu.memory_space<vmem>>, vector<1x32xf32>
    %4 = vector.broadcast %3 : vector<1x32xf32> to vector<16x32xf32>
    %5 = arith.addf %2, %4 : vector<16x32xf32>
    %cst_5 = arith.constant 0.000000e+00 : f32
    %6 = vector.broadcast %cst_5 : f32 to vector<16x32xf32>
    %7 = arith.maximumf %5, %6 : vector<16x32xf32>
    %c0_6 = arith.constant 0 : index
    %c0_7 = arith.constant 0 : index
    %8 = vector.load %arg4[%c0_6, %c0_7] : memref<16x32xf32, #tpu.memory_space<vmem>>, vector<16x32xf32>
    tpu.vector_store %arg4[%c0_6, %c0_7], %7 {strides = array<i32>} : memref<16x32xf32, #tpu.memory_space<vmem>>, vector<16x32xf32>,
    return
  }
  func.func @transform_0(%arg0: i32) -> (i32, i32) {
    %c0_i32 = arith.constant 0 : i32
    %c0_i32_0 = arith.constant 0 : i32
    return %arg0, %c0_i32 : i32, i32
  }
  func.func @transform_1(%arg0: i32) -> (i32, i32) {
    %c0_i32 = arith.constant 0 : i32
    %c0_i32_0 = arith.constant 0 : i32
    %c0_i32_1 = arith.constant 0 : i32
    return %c0_i32, %c0_i32_0 : i32, i32
  }
  func.func @transform_2(%arg0: i32) -> (i32, i32) {
    %c0_i32 = arith.constant 0 : i32
    %c0_i32_0 = arith.constant 0 : i32
    %c0_i32_1 = arith.constant 0 : i32
    return %c0_i32, %c0_i32_0 : i32, i32
  }
  func.func @transform_3(%arg0: i32) -> (i32, i32) {
    %c0_i32 = arith.constant 0 : i32
    %c0_i32_0 = arith.constant 0 : i32
    return %arg0, %c0_i32 : i32, i32
  }
}

</mosaic_0001>

<llo_original>
// kernel: tpu_custom_call.1
$region0: #{tpu_custom_call.1}
  #allocation0 [shape = 'u32[]', space=smem, size = 0x4, offset = 0x4, fixed_abs, tag = 'smem constant byte address 0x4 - core index']
  #allocation1 [shape = 'u32[72,128]{1,0:T(1,128)}', space=vmem, size = 0x9000, scoped, tag = 'internal scratch']
  %s0 = inlined_call_operand.hbm [shape: f32[16,32], index: 0, kind: input, shape index: {}]
  %s1 = inlined_call_operand.hbm [shape: f32[32,32], index: 1, kind: input, shape index: {}]
  %s2 = inlined_call_operand.vmem [shape: f32[1,32], index: 2, kind: input, shape index: {}]
  %s3 = inlined_call_operand.hbm [shape: f32[16,32], index: 3, kind: output, shape index: {}]
  %s4 = sld [smem:[#allocation0]]
  $region30: #{tpu_custom_call.1} parent=0
    _
  %s6 = ssub.s32 1, %s4
  %s7 = scalar_select 0, %s6, %s4
  $region1: #{tpu_custom_call.1} parent=0
    #allocation2 [shape = 'u8[8192]{0}', space=vmem, size = 0x2000, scoped, tag = 'input window, operand 0, single buffered']
    #allocation3 [shape = 's32[1]{0}', space=sflag, size = 0x4, scoped, tag = 'scoped memory for tpu_custom_call.1']
    #allocation4 [shape = 's32[1]{0}', space=sflag, size = 0x4, scoped, tag = 'scoped memory for tpu_custom_call.1']
    #allocation5 [shape = 'u8[16384]{0}', space=vmem, size = 0x4000, scoped, tag = 'input window, operand 1, single buffered']
    #allocation6 [shape = 's32[1]{0}', space=sflag, size = 0x4, scoped, tag = 'scoped memory for tpu_custom_call.1']
    #allocation7 [shape = 'u8[8192]{0}', space=vmem, size = 0x2000, scoped, tag = 'output window, operand 0, single buffered']
    %8 = vsyncpa [#allocation3], 0
    %9 = vsyncpa [#allocation6], 0
    %10 = vsyncpa [#allocation4], 0
    // Predicated region
    $region2: #{tpu_custom_call.1} parent=1 // pred_check
      _
    $region3: #{tpu_custom_call.1} parent=1 // pred_check_branch
      %12 = sbr.rel (0) target = $region5
    $region4: #{tpu_custom_call.1} parent=1 // pred_region
      %14 = vsyncadd [#allocation3], 0
      %s15 = sshll.u32 %s0, 4
      %s16 = int_to_ptr.hbm [resolvable:$true] %s15
      %s17 = sshll.u32 [#allocation2], 4
      %s18 = int_to_ptr.vmem [resolvable:$true] %s17
      %23 = dma.hbm_to_vmem [thread:$0]  %s16, 256, %s18, [#allocation3], 128, 128, 8
    $region5: #{tpu_custom_call.1} parent=1 // pred_fallthru
      _
    // Predicated region
    $region6: #{tpu_custom_call.1} parent=1 // pred_check
      _
    $region7: #{tpu_custom_call.1} parent=1 // pred_check_branch
      %25 = sbr.rel (0) target = $region9
    $region8: #{tpu_custom_call.1} parent=1 // pred_region
      %27 = vsyncadd [#allocation6], 0
      %s28 = sshll.u32 %s1, 4
      %s29 = int_to_ptr.hbm [resolvable:$true] %s28
      %s30 = sshll.u32 [#allocation5], 4
      %s31 = int_to_ptr.vmem [resolvable:$true] %s30
      %36 = dma.hbm_to_vmem [thread:$0]  %s29, 512, %s31, [#allocation6], 128, 128, 8
    $region9: #{tpu_custom_call.1} parent=1 // pred_fallthru
      _
    // Predicated region
    $region10: #{tpu_custom_call.1} parent=1 // pred_check
      _
    $region11: #{tpu_custom_call.1} parent=1 // pred_check_branch
      %38 = sbr.rel (0) target = $region13
    $region12: #{tpu_custom_call.1} parent=1 // pred_region
      _
    $region13: #{tpu_custom_call.1} parent=1 // pred_fallthru
      _
    // Predicated region
    $region14: #{tpu_custom_call.1} parent=1 // pred_check
      _
    $region15: #{tpu_custom_call.1} parent=1 // pred_check_branch
      %40 = sbr.rel (0) target = $region17
    $region16: #{tpu_custom_call.1} parent=1 // pred_region
      %42 = dma.done [#allocation3], 256
    $region17: #{tpu_custom_call.1} parent=1 // pred_fallthru
      _
    // Predicated region
    $region18: #{tpu_custom_call.1} parent=1 // pred_check
      _
    $region19: #{tpu_custom_call.1} parent=1 // pred_check_branch
      %44 = sbr.rel (0) target = $region21
    $region20: #{tpu_custom_call.1} parent=1 // pred_region
      %46 = dma.done [#allocation6], 512
    $region21: #{tpu_custom_call.1} parent=1 // pred_fallthru
      _
    %v47 = vld [vmem:[#allocation2] sm:$0xff]
    %v48 = vld [vmem:[#allocation2 + $0x8] sm:$0xff]
    %v49 = vld [vmem:[#allocation5] sm:$0xff]
    %v50 = vld [vmem:[#allocation5 + $0x8] sm:$0xff]
    %v51 = vld [vmem:[#allocation5 + $0x10] sm:$0xff]
    %v52 = vld [vmem:[#allocation5 + $0x18] sm:$0xff]
    %v53 = vld [vmem:[%s2] sm:$0x1]
    %v55 = vperm.slane %v53, 0
    %vm57 = vcmask 261120
    %v59 = vsel %vm57, %v47, 0
    %v62 = vsel %vm57, %v48, 0
    %64 = vmatpush.msra.mxu0 0.0
    %65 = vmatpush.msra.mxu0 0.0
    %66 = vmatpush.msra.mxu0 0.0
    %67 = vmatpush.msra.mxu0 0.0
    %68 = vmatpush.msra.mxu0 0.0
    %69 = vmatpush.msra.mxu0 0.0
    %70 = vmatpush.msra.mxu0 0.0
    %71 = vmatpush.msra.mxu0 0.0
    %72 = vmatpush.msra.mxu0 0.0
    %73 = vmatpush.msra.mxu0 0.0
    %74 = vmatpush.msra.mxu0 0.0
    %75 = vmatpush.msra.mxu0 0.0
    %76 = vmatpush.msra.mxu0 %v52
    %77 = vmatpush.msra.mxu0 %v51
    %78 = vmatpush.msra.mxu0 %v50
    %79 = vmatpush.msra.mxu0 %v49
    %80 = vmatmul.f32.gmra.mxu0 %v59
    %v81 = vpop.f32.mrf.mxu0
    %v82 = vadd.f32 %v55, %v81
    %83 = vmatmul.f32.gmra.mxu0 %v62
    %v84 = vpop.f32.mrf.mxu0
    %v85 = vadd.f32 %v55, %v84
    %86 = vdwg.mxu0
    %v87 = vmax.f32 %v82, 0.0
    %v88 = vmax.f32 %v85, 0.0
    %89 = vst.msk [vmem:[#allocation7] sm:$0xff] %vm57, %v87
    %90 = vst.msk [vmem:[#allocation7 + $0x8] sm:$0xff] %vm57, %v88
    // Predicated region
    $region22: #{tpu_custom_call.1} parent=1 // pred_check
      _
    $region23: #{tpu_custom_call.1} parent=1 // pred_check_branch
      %92 = sbr.rel (0) target = $region25
    $region24: #{tpu_custom_call.1} parent=1 // pred_region
      %94 = vsyncadd [#allocation4], 0
      %s95 = sshll.u32 [#allocation7], 4
      %s96 = int_to_ptr.vmem [resolvable:$true] %s95
      %s97 = sshll.u32 %s3, 4
      %s98 = int_to_ptr.hbm [resolvable:$true] %s97
      %103 = dma.vmem_to_hbm [thread:$0]  %s96, 256, %s98, [#allocation4], 128, 128, 8
    $region25: #{tpu_custom_call.1} parent=1 // pred_fallthru
      _
    // Predicated region
    $region26: #{tpu_custom_call.1} parent=1 // pred_check
      _
    $region27: #{tpu_custom_call.1} parent=1 // pred_check_branch
      %105 = sbr.rel (0) target = $region29
    $region28: #{tpu_custom_call.1} parent=1 // pred_region
      %107 = dma.done [#allocation4], 256
    $region29: #{tpu_custom_call.1} parent=1 // pred_fallthru
      _
    %108 = vsyncpa [#allocation3], 1
    %109 = vsyncpa [#allocation6], 1
    %110 = vsyncpa [#allocation4], 1

</llo_original>
